<compile_context>
chip_gen: v5e
topology: v5e:2x2
jax: 0.10.0
libtpu: 0.0.40
codegen_flags: <defaults>
</compile_context>

<pallas_src>
import jax
import jax.numpy as jnp
from jax.experimental import pallas as pl
from jax.experimental.pallas import tpu as pltpu


def rnn_seq_kernel(x_ref, h0_ref, wi_ref, wh_ref, bh_ref, wo_ref, bo_ref,
                   out_ref, hlast_ref, hs_ref):
    # x_ref:     (T*B, I)      all step inputs, time-major flattened
    # h0_ref:    (B, Hp)       initial hidden state (zero-padded to Hp lanes)
    # wi_ref:    (I, Hp)       Wi^T, lane-padded
    # wh_ref:    (Hp, Hp)      Wh^T, padded rows/cols are zero
    # bh_ref:    (1, Hp)       h2h bias, lane-padded
    # wo_ref:    (Hp, Op)      Wo^T, padded rows are zero
    # bo_ref:    (1, Op)       h2o bias, lane-padded
    # out_ref:   (T*B, Op)     all step outputs (lane-dense slab)
    # hlast_ref: (B, Hp)       final hidden state
    # hs_ref:    (T*B, Hp)     VMEM scratch: hidden states of every step
    TB, _ = x_ref.shape
    B, Hp = h0_ref.shape
    T = TB // B

    # (1) Hoisted i2h for ALL steps: one batched matmul, off the serial chain.
    pre = jnp.dot(x_ref[...], wi_ref[...],
                  preferred_element_type=jnp.float32) + bh_ref[...]   # (T*B, Hp)

    # (2) Serial recurrence: only h @ Wh^T remains on the critical path.
    #     T is static -> fully unrolled, full LLO scheduler visibility.
    h = h0_ref[...]                                                   # (B, Hp)
    for t in range(T):
        h = jnp.tanh(pre[t * B:(t + 1) * B, :]
                     + jnp.dot(h, wh_ref[...],
                               preferred_element_type=jnp.float32))
        hs_ref[t * B:(t + 1) * B, :] = h
    hlast_ref[...] = h

    # (3) Deferred h2o: one batched matmul over all staged hidden states.
    out_ref[...] = (jnp.dot(hs_ref[...], wo_ref[...],
                            preferred_element_type=jnp.float32) + bo_ref[...])


def prepare_params(params, hidden_size, lane=128):
    """One-time weight prep: transpose + zero-pad H and O up to 128 lanes."""
    wi, wh, bh, wo, bo = params                     # torch nn.Linear layouts
    H = hidden_size
    I = wi.shape[1]
    O = wo.shape[0]
    Hp = ((max(H, 1) + lane - 1) // lane) * lane
    Op = ((max(O, 1) + lane - 1) // lane) * lane
    wi_pad = jnp.zeros((I, Hp), jnp.float32).at[:, :H].set(wi.T.astype(jnp.float32))
    wh_pad = jnp.zeros((Hp, Hp), jnp.float32).at[:H, :H].set(wh.T.astype(jnp.float32))
    bh_pad = jnp.zeros((1, Hp), jnp.float32).at[:, :H].set(bh.reshape(1, H).astype(jnp.float32))
    wo_pad = jnp.zeros((Hp, Op), jnp.float32).at[:H, :O].set(wo.T.astype(jnp.float32))
    bo_pad = jnp.zeros((1, Op), jnp.float32).at[:, :O].set(bo.reshape(1, O).astype(jnp.float32))
    return wi_pad, wh_pad, bh_pad, wo_pad, bo_pad


def rnn_forward_seq(xs, h0, wi_pad, wh_pad, bh_pad, wo_pad, bo_pad,
                    hidden_size, output_size):
    """Runs all T RNN steps in one pallas_call.

    Returns (outs (T, B, output_size), final hidden (B, hidden_size))."""
    T, B, I = xs.shape
    Hp = wh_pad.shape[0]
    Op = wo_pad.shape[1]

    xs_flat = xs.reshape(T * B, I).astype(jnp.float32)
    h0_pad = jnp.zeros((B, Hp), jnp.float32).at[:, :hidden_size].set(
        h0.astype(jnp.float32))

    vmem = pl.BlockSpec(memory_space=pltpu.MemorySpace.VMEM)
    out_flat, h_last_pad = pl.pallas_call(
        rnn_seq_kernel,
        out_shape=(
            jax.ShapeDtypeStruct((T * B, Op), jnp.float32),
            jax.ShapeDtypeStruct((B, Hp), jnp.float32),
        ),
        in_specs=[vmem] * 7,
        out_specs=(vmem, vmem),
        scratch_shapes=[pltpu.VMEM((T * B, Hp), jnp.float32)],
    )(xs_flat, h0_pad, wi_pad, wh_pad, bh_pad, wo_pad, bo_pad)

    outs = out_flat.reshape(T, B, Op)[..., :output_size]
    h_last = h_last_pad[:, :hidden_size]
    return outs, h_last


def rnn_forward(x, hidden_state, wi_pad, wh_pad, bh_pad, wo_pad, bo_pad,
                hidden_size, output_size):
    """Single step; same signature/semantics as the PyTorch module's forward()."""
    outs, h_new = rnn_forward_seq(x[None], hidden_state,
                                  wi_pad, wh_pad, bh_pad, wo_pad, bo_pad,
                                  hidden_size, output_size)
    return outs[0], h_new


def init_params(key, input_size, hidden_size, output_size):
    """Deterministic parameter init matching nn.Linear shapes."""
    k1, k2, k3, k4, k5 = jax.random.split(key, 5)
    wi = jax.random.normal(k1, (hidden_size, input_size), jnp.float32) * 0.1   # i2h.weight
    wh = jax.random.normal(k2, (hidden_size, hidden_size), jnp.float32) * 0.1  # h2h.weight
    bh = jax.random.normal(k3, (hidden_size,), jnp.float32) * 0.1              # h2h.bias
    wo = jax.random.normal(k4, (output_size, hidden_size), jnp.float32) * 0.1  # h2o.weight
    bo = jax.random.normal(k5, (output_size,), jnp.float32) * 0.1              # h2o.bias
    return wi, wh, bh, wo, bo


if __name__ == "__main__":
    input_size, hidden_size, output_size, batch_size, seq_len = 16, 32, 16, 8, 8

    key = jax.random.PRNGKey(0)
    kx, kp = jax.random.split(key, 2)
    xs = jax.random.normal(kx, (seq_len, batch_size, input_size), jnp.float32)
    hidden0 = jnp.zeros((batch_size, hidden_size), jnp.float32)  # init_zero_hidden
    params = init_params(kp, input_size, hidden_size, output_size)

    # One-time (hoisted) weight prep: transpose + zero-pad to 128 lanes.
    wi_pad, wh_pad, bh_pad, wo_pad, bo_pad = prepare_params(params, hidden_size)

    # Whole sequence in one kernel invocation.
    outs, h_last = rnn_forward_seq(xs, hidden0, wi_pad, wh_pad, bh_pad,
                                   wo_pad, bo_pad, hidden_size, output_size)
    jax.block_until_ready((outs, h_last))

    # Pure-JAX reference (per-step math identical to the PyTorch forward).
    wi, wh, bh, wo, bo = params
    h = hidden0
    ref_outs = []
    for t in range(seq_len):
        h = jnp.tanh(xs[t] @ wi.T + (h @ wh.T + bh))
        ref_outs.append(h @ wo.T + bo)
    ref_outs = jnp.stack(ref_outs)
    assert jnp.allclose(h_last, h, atol=1e-4), "hidden mismatch"
    assert jnp.allclose(outs, ref_outs, atol=1e-4), "output mismatch"

    # Single-step path (matches the module's forward(x, hidden) signature).
    out1, h1 = rnn_forward(xs[0], hidden0, wi_pad, wh_pad, bh_pad, wo_pad,
                           bo_pad, hidden_size, output_size)
    h1_ref = jnp.tanh(xs[0] @ wi.T + (hidden0 @ wh.T + bh))
    o1_ref = h1_ref @ wo.T + bo
    assert jnp.allclose(h1, h1_ref, atol=1e-4), "single-step hidden mismatch"
    assert jnp.allclose(out1, o1_ref, atol=1e-4), "single-step output mismatch"

    print("KERNEL_OK")
</pallas_src>

<mosaic_0001>
module attributes {stable_mosaic.version = 11 : i64} {
  func.func @rnn_seq_kernel(%arg0: memref<64x16xf32, #tpu.memory_space<vmem>>, %arg1: memref<8x128xf32, #tpu.memory_space<vmem>>, %arg2: memref<16x128xf32, #tpu.memory_space<vmem>>, %arg3: memref<128x128xf32, #tpu.memory_space<vmem>>, %arg4: memref<1x128xf32, #tpu.memory_space<vmem>>, %arg5: memref<128x128xf32, #tpu.memory_space<vmem>>, %arg6: memref<1x128xf32, #tpu.memory_space<vmem>>, %arg7: memref<64x128xf32, #tpu.memory_space<vmem>>, %arg8: memref<8x128xf32, #tpu.memory_space<vmem>>, %arg9: memref<64x128xf32, #tpu.memory_space<vmem>>) attributes {dimension_semantics = [], scalar_prefetch = 0 : i64, scratch_operands = 1 : i64, tpu.core_type = #tpu.core_type<tc>} {
    %c0 = arith.constant 0 : index
    %c0_0 = arith.constant 0 : index
    %0 = vector.load %arg0[%c0, %c0_0] : memref<64x16xf32, #tpu.memory_space<vmem>>, vector<64x16xf32>
    %c0_1 = arith.constant 0 : index
    %c0_2 = arith.constant 0 : index
    %1 = vector.load %arg2[%c0_1, %c0_2] : memref<16x128xf32, #tpu.memory_space<vmem>>, vector<16x128xf32>
    %cst = arith.constant dense<0.000000e+00> : vector<64x128xf32>
    %2 = tpu.matmul %0, %1, %cst {dimension_numbers = #tpu.dot_dimension_numbers<[1], [0], [0], [1], [0, 0, 1, 1], [], []>} : vector<64x16xf32>, vector<16x128xf32>, vector<64x128xf32> -> vector<64x128xf32>
    %c0_3 = arith.constant 0 : index
    %c0_4 = arith.constant 0 : index
    %3 = vector.load %arg4[%c0_3, %c0_4] : memref<1x128xf32, #tpu.memory_space<vmem>>, vector<1x128xf32>
    %4 = vector.broadcast %3 : vector<1x128xf32> to vector<64x128xf32>
    %5 = arith.addf %2, %4 : vector<64x128xf32>
    %c0_5 = arith.constant 0 : index
    %c0_6 = arith.constant 0 : index
    %6 = vector.load %arg1[%c0_5, %c0_6] : memref<8x128xf32, #tpu.memory_space<vmem>>, vector<8x128xf32>
    %7 = vector.extract_strided_slice %5 {offsets = [0, 0], sizes = [8, 128], strides = [1, 1]} : vector<64x128xf32> to vector<8x128xf32>
    %c0_7 = arith.constant 0 : index
    %c0_8 = arith.constant 0 : index
    %8 = vector.load %arg3[%c0_7, %c0_8] : memref<128x128xf32, #tpu.memory_space<vmem>>, vector<128x128xf32>
    %cst_9 = arith.constant dense<0.000000e+00> : vector<8x128xf32>
    %9 = tpu.matmul %6, %8, %cst_9 {dimension_numbers = #tpu.dot_dimension_numbers<[1], [0], [0], [1], [0, 0, 1, 1], [], []>} : vector<8x128xf32>, vector<128x128xf32>, vector<8x128xf32> -> vector<8x128xf32>
    %10 = arith.addf %7, %9 : vector<8x128xf32>
    %11 = math.tanh %10 : vector<8x128xf32>
    %c0_10 = arith.constant 0 : index
    %c0_11 = arith.constant 0 : index
    %12 = vector.load %arg9[%c0_10, %c0_11] : memref<64x128xf32, #tpu.memory_space<vmem>>, vector<8x128xf32>
    tpu.vector_store %arg9[%c0_10, %c0_11], %11 {strides = array<i32>} : memref<64x128xf32, #tpu.memory_space<vmem>>, vector<8x128xf32>,
    %13 = vector.extract_strided_slice %5 {offsets = [8, 0], sizes = [8, 128], strides = [1, 1]} : vector<64x128xf32> to vector<8x128xf32>
    %c0_12 = arith.constant 0 : index
    %c0_13 = arith.constant 0 : index
    %14 = vector.load %arg3[%c0_12, %c0_13] : memref<128x128xf32, #tpu.memory_space<vmem>>, vector<128x128xf32>
    %cst_14 = arith.constant dense<0.000000e+00> : vector<8x128xf32>
    %15 = tpu.matmul %11, %14, %cst_14 {dimension_numbers = #tpu.dot_dimension_numbers<[1], [0], [0], [1], [0, 0, 1, 1], [], []>} : vector<8x128xf32>, vector<128x128xf32>, vector<8x128xf32> -> vector<8x128xf32>
    %16 = arith.addf %13, %15 : vector<8x128xf32>
    %17 = math.tanh %16 : vector<8x128xf32>
    %c8 = arith.constant 8 : index
    %c0_15 = arith.constant 0 : index
    %18 = vector.load %arg9[%c8, %c0_15] : memref<64x128xf32, #tpu.memory_space<vmem>>, vector<8x128xf32>
    tpu.vector_store %arg9[%c8, %c0_15], %17 {strides = array<i32>} : memref<64x128xf32, #tpu.memory_space<vmem>>, vector<8x128xf32>,
    %19 = vector.extract_strided_slice %5 {offsets = [16, 0], sizes = [8, 128], strides = [1, 1]} : vector<64x128xf32> to vector<8x128xf32>
    %c0_16 = arith.constant 0 : index
    %c0_17 = arith.constant 0 : index
    %20 = vector.load %arg3[%c0_16, %c0_17] : memref<128x128xf32, #tpu.memory_space<vmem>>, vector<128x128xf32>
    %cst_18 = arith.constant dense<0.000000e+00> : vector<8x128xf32>
    %21 = tpu.matmul %17, %20, %cst_18 {dimension_numbers = #tpu.dot_dimension_numbers<[1], [0], [0], [1], [0, 0, 1, 1], [], []>} : vector<8x128xf32>, vector<128x128xf32>, vector<8x128xf32> -> vector<8x128xf32>
    %22 = arith.addf %19, %21 : vector<8x128xf32>
    %23 = math.tanh %22 : vector<8x128xf32>
    %c16 = arith.constant 16 : index
    %c0_19 = arith.constant 0 : index
    %24 = vector.load %arg9[%c16, %c0_19] : memref<64x128xf32, #tpu.memory_space<vmem>>, vector<8x128xf32>
    tpu.vector_store %arg9[%c16, %c0_19], %23 {strides = array<i32>} : memref<64x128xf32, #tpu.memory_space<vmem>>, vector<8x128xf32>,
    %25 = vector.extract_strided_slice %5 {offsets = [24, 0], sizes = [8, 128], strides = [1, 1]} : vector<64x128xf32> to vector<8x128xf32>
    %c0_20 = arith.constant 0 : index
    %c0_21 = arith.constant 0 : index
    %26 = vector.load %arg3[%c0_20, %c0_21] : memref<128x128xf32, #tpu.memory_space<vmem>>, vector<128x128xf32>
    %cst_22 = arith.constant dense<0.000000e+00> : vector<8x128xf32>
    %27 = tpu.matmul %23, %26, %cst_22 {dimension_numbers = #tpu.dot_dimension_numbers<[1], [0], [0], [1], [0, 0, 1, 1], [], []>} : vector<8x128xf32>, vector<128x128xf32>, vector<8x128xf32> -> vector<8x128xf32>
    %28 = arith.addf %25, %27 : vector<8x128xf32>
    %29 = math.tanh %28 : vector<8x128xf32>
    %c24 = arith.constant 24 : index
    %c0_23 = arith.constant 0 : index
    %30 = vector.load %arg9[%c24, %c0_23] : memref<64x128xf32, #tpu.memory_space<vmem>>, vector<8x128xf32>
    tpu.vector_store %arg9[%c24, %c0_23], %29 {strides = array<i32>} : memref<64x128xf32, #tpu.memory_space<vmem>>, vector<8x128xf32>,
    %31 = vector.extract_strided_slice %5 {offsets = [32, 0], sizes = [8, 128], strides = [1, 1]} : vector<64x128xf32> to vector<8x128xf32>
    %c0_24 = arith.constant 0 : index
    %c0_25 = arith.constant 0 : index
    %32 = vector.load %arg3[%c0_24, %c0_25] : memref<128x128xf32, #tpu.memory_space<vmem>>, vector<128x128xf32>
    %cst_26 = arith.constant dense<0.000000e+00> : vector<8x128xf32>
    %33 = tpu.matmul %29, %32, %cst_26 {dimension_numbers = #tpu.dot_dimension_numbers<[1], [0], [0], [1], [0, 0, 1, 1], [], []>} : vector<8x128xf32>, vector<128x128xf32>, vector<8x128xf32> -> vector<8x128xf32>
    %34 = arith.addf %31, %33 : vector<8x128xf32>
    %35 = math.tanh %34 : vector<8x128xf32>
    %c32 = arith.constant 32 : index
    %c0_27 = arith.constant 0 : index
    %36 = vector.load %arg9[%c32, %c0_27] : memref<64x128xf32, #tpu.memory_space<vmem>>, vector<8x128xf32>
    tpu.vector_store %arg9[%c32, %c0_27], %35 {strides = array<i32>} : memref<64x128xf32, #tpu.memory_space<vmem>>, vector<8x128xf32>,
    %37 = vector.extract_strided_slice %5 {offsets = [40, 0], sizes = [8, 128], strides = [1, 1]} : vector<64x128xf32> to vector<8x128xf32>
    %c0_28 = arith.constant 0 : index
    %c0_29 = arith.constant 0 : index
    %38 = vector.load %arg3[%c0_28, %c0_29] : memref<128x128xf32, #tpu.memory_space<vmem>>, vector<128x128xf32>
    %cst_30 = arith.constant dense<0.000000e+00> : vector<8x128xf32>
    %39 = tpu.matmul %35, %38, %cst_30 {dimension_numbers = #tpu.dot_dimension_numbers<[1], [0], [0], [1], [0, 0, 1, 1], [], []>} : vector<8x128xf32>, vector<128x128xf32>, vector<8x128xf32> -> vector<8x128xf32>
    %40 = arith.addf %37, %39 : vector<8x128xf32>
    %41 = math.tanh %40 : vector<8x128xf32>
    %c40 = arith.constant 40 : index
    %c0_31 = arith.constant 0 : index
    %42 = vector.load %arg9[%c40, %c0_31] : memref<64x128xf32, #tpu.memory_space<vmem>>, vector<8x128xf32>
    tpu.vector_store %arg9[%c40, %c0_31], %41 {strides = array<i32>} : memref<64x128xf32, #tpu.memory_space<vmem>>, vector<8x128xf32>,
    %43 = vector.extract_strided_slice %5 {offsets = [48, 0], sizes = [8, 128], strides = [1, 1]} : vector<64x128xf32> to vector<8x128xf32>
    %c0_32 = arith.constant 0 : index
    %c0_33 = arith.constant 0 : index
    %44 = vector.load %arg3[%c0_32, %c0_33] : memref<128x128xf32, #tpu.memory_space<vmem>>, vector<128x128xf32>
    %cst_34 = arith.constant dense<0.000000e+00> : vector<8x128xf32>
    %45 = tpu.matmul %41, %44, %cst_34 {dimension_numbers = #tpu.dot_dimension_numbers<[1], [0], [0], [1], [0, 0, 1, 1], [], []>} : vector<8x128xf32>, vector<128x128xf32>, vector<8x128xf32> -> vector<8x128xf32>
    %46 = arith.addf %43, %45 : vector<8x128xf32>
    %47 = math.tanh %46 : vector<8x128xf32>
    %c48 = arith.constant 48 : index
    %c0_35 = arith.constant 0 : index
    %48 = vector.load %arg9[%c48, %c0_35] : memref<64x128xf32, #tpu.memory_space<vmem>>, vector<8x128xf32>
    tpu.vector_store %arg9[%c48, %c0_35], %47 {strides = array<i32>} : memref<64x128xf32, #tpu.memory_space<vmem>>, vector<8x128xf32>,
    %49 = vector.extract_strided_slice %5 {offsets = [56, 0], sizes = [8, 128], strides = [1, 1]} : vector<64x128xf32> to vector<8x128xf32>
    %c0_36 = arith.constant 0 : index
    %c0_37 = arith.constant 0 : index
    %50 = vector.load %arg3[%c0_36, %c0_37] : memref<128x128xf32, #tpu.memory_space<vmem>>, vector<128x128xf32>
    %cst_38 = arith.constant dense<0.000000e+00> : vector<8x128xf32>
    %51 = tpu.matmul %47, %50, %cst_38 {dimension_numbers = #tpu.dot_dimension_numbers<[1], [0], [0], [1], [0, 0, 1, 1], [], []>} : vector<8x128xf32>, vector<128x128xf32>, vector<8x128xf32> -> vector<8x128xf32>
    %52 = arith.addf %49, %51 : vector<8x128xf32>
    %53 = math.tanh %52 : vector<8x128xf32>
    %c56 = arith.constant 56 : index
    %c0_39 = arith.constant 0 : index
    %54 = vector.load %arg9[%c56, %c0_39] : memref<64x128xf32, #tpu.memory_space<vmem>>, vector<8x128xf32>
    tpu.vector_store %arg9[%c56, %c0_39], %53 {strides = array<i32>} : memref<64x128xf32, #tpu.memory_space<vmem>>, vector<8x128xf32>,
    %c0_40 = arith.constant 0 : index
    %c0_41 = arith.constant 0 : index
    %55 = vector.load %arg8[%c0_40, %c0_41] : memref<8x128xf32, #tpu.memory_space<vmem>>, vector<8x128xf32>
    tpu.vector_store %arg8[%c0_40, %c0_41], %53 {strides = array<i32>} : memref<8x128xf32, #tpu.memory_space<vmem>>, vector<8x128xf32>,
    %c0_42 = arith.constant 0 : index
    %c0_43 = arith.constant 0 : index
    %56 = vector.load %arg9[%c0_42, %c0_43] : memref<64x128xf32, #tpu.memory_space<vmem>>, vector<64x128xf32>
    %c0_44 = arith.constant 0 : index
    %c0_45 = arith.constant 0 : index
    %57 = vector.load %arg5[%c0_44, %c0_45] : memref<128x128xf32, #tpu.memory_space<vmem>>, vector<128x128xf32>
    %cst_46 = arith.constant dense<0.000000e+00> : vector<64x128xf32>
    %58 = tpu.matmul %56, %57, %cst_46 {dimension_numbers = #tpu.dot_dimension_numbers<[1], [0], [0], [1], [0, 0, 1, 1], [], []>} : vector<64x128xf32>, vector<128x128xf32>, vector<64x128xf32> -> vector<64x128xf32>
    %c0_47 = arith.constant 0 : index
    %c0_48 = arith.constant 0 : index
    %59 = vector.load %arg6[%c0_47, %c0_48] : memref<1x128xf32, #tpu.memory_space<vmem>>, vector<1x128xf32>
    %60 = vector.broadcast %59 : vector<1x128xf32> to vector<64x128xf32>
    %61 = arith.addf %58, %60 : vector<64x128xf32>
    %c0_49 = arith.constant 0 : index
    %c0_50 = arith.constant 0 : index
    %62 = vector.load %arg7[%c0_49, %c0_50] : memref<64x128xf32, #tpu.memory_space<vmem>>, vector<64x128xf32>
    tpu.vector_store %arg7[%c0_49, %c0_50], %61 {strides = array<i32>} : memref<64x128xf32, #tpu.memory_space<vmem>>, vector<64x128xf32>,
    return
  }
}

</mosaic_0001>

<llo_original>
// kernel: tpu_custom_call.1
$region0: #{tpu_custom_call.1}
  #allocation0 [shape = 'u32[]', space=smem, size = 0x4, offset = 0x4, fixed_abs, tag = 'smem constant byte address 0x4 - core index']
  #allocation1 [shape = 'u32[72,128]{1,0:T(1,128)}', space=vmem, size = 0x9000, scoped, tag = 'internal scratch']
  #allocation2 [shape = 'f32[64,128]{1,0:T(8,128)}', space=vmem, size = 0x8000, scoped, tag = 'scratch operand']
  %s0 = inlined_call_operand.vmem [shape: f32[64,16], index: 0, kind: input, shape index: {}]
  %s1 = inlined_call_operand.vmem [shape: f32[8,128], index: 1, kind: input, shape index: {}]
  %s2 = inlined_call_operand.vmem [shape: f32[16,128], index: 2, kind: input, shape index: {}]
  %s3 = inlined_call_operand.hbm [shape: f32[128,128], index: 3, kind: input, shape index: {}]
  %s4 = inlined_call_operand.vmem [shape: f32[1,128], index: 4, kind: input, shape index: {}]
  %s5 = inlined_call_operand.hbm [shape: f32[128,128], index: 5, kind: input, shape index: {}]
  %s6 = inlined_call_operand.vmem [shape: f32[1,128], index: 6, kind: input, shape index: {}]
  %s7 = inlined_call_operand.hbm [shape: f32[64,128], index: 7, kind: output, shape index: {0}]
  %s8 = inlined_call_operand.hbm [shape: f32[8,128], index: 8, kind: output, shape index: {1}]
  %9 = xla_tuple %s7, %s8
  %s10 = sld [smem:[#allocation0]]
  $region54: #{tpu_custom_call.1} parent=0
    _
  %s12 = ssub.s32 1, %s10
  %s13 = scalar_select 0, %s12, %s10
  $region1: #{tpu_custom_call.1} parent=0
    #allocation3 [shape = 'u8[65536]{0}', space=vmem, size = 0x10000, scoped, tag = 'input window, operand 3, single buffered']
    #allocation4 [shape = 's32[1]{0}', space=sflag, size = 0x4, scoped, tag = 'scoped memory for tpu_custom_call.1']
    #allocation5 [shape = 's32[1]{0}', space=sflag, size = 0x4, scoped, tag = 'scoped memory for tpu_custom_call.1']
    #allocation6 [shape = 'u8[65536]{0}', space=vmem, size = 0x10000, scoped, tag = 'input window, operand 5, single buffered']
    #allocation7 [shape = 's32[1]{0}', space=sflag, size = 0x4, scoped, tag = 'scoped memory for tpu_custom_call.1']
    #allocation8 [shape = 'u8[32768]{0}', space=vmem, size = 0x8000, scoped, tag = 'output window, operand 0, single buffered']
    #allocation9 [shape = 'u8[4096]{0}', space=vmem, size = 0x1000, scoped, tag = 'output window, operand 1, single buffered']
    #allocation10 [shape = 's32[1]{0}', space=sflag, size = 0x4, scoped, tag = 'scoped memory for tpu_custom_call.1']
    %14 = vsyncpa [#allocation4], 0
    %15 = vsyncpa [#allocation7], 0
    %16 = vsyncpa [#allocation5], 0
    %17 = vsyncpa [#allocation10], 0
    // Predicated region
    $region2: #{tpu_custom_call.1} parent=1 // pred_check
      _
    $region3: #{tpu_custom_call.1} parent=1 // pred_check_branch
      %19 = sbr.rel (0) target = $region5
    $region4: #{tpu_custom_call.1} parent=1 // pred_region
      _
    $region5: #{tpu_custom_call.1} parent=1 // pred_fallthru
      _
    // Predicated region
    $region6: #{tpu_custom_call.1} parent=1 // pred_check
      _
    $region7: #{tpu_custom_call.1} parent=1 // pred_check_branch
      %21 = sbr.rel (0) target = $region9
    $region8: #{tpu_custom_call.1} parent=1 // pred_region
      _
    $region9: #{tpu_custom_call.1} parent=1 // pred_fallthru
      _
    // Predicated region
    $region10: #{tpu_custom_call.1} parent=1 // pred_check
      _
    $region11: #{tpu_custom_call.1} parent=1 // pred_check_branch
      %23 = sbr.rel (0) target = $region13
    $region12: #{tpu_custom_call.1} parent=1 // pred_region
      _
    $region13: #{tpu_custom_call.1} parent=1 // pred_fallthru
      _
    // Predicated region
    $region14: #{tpu_custom_call.1} parent=1 // pred_check
      _
    $region15: #{tpu_custom_call.1} parent=1 // pred_check_branch
      %25 = sbr.rel (0) target = $region17
    $region16: #{tpu_custom_call.1} parent=1 // pred_region
      %27 = vsyncadd [#allocation4], 0
      %s28 = sshll.u32 %s3, 4
      %s29 = int_to_ptr.hbm [resolvable:$true] %s28
      %s30 = sshll.u32 [#allocation3], 4
      %s31 = int_to_ptr.vmem [resolvable:$true] %s30
      %36 = dma.hbm_to_vmem [thread:$0]  %s29, 2048, %s31, [#allocation4], 128, 128, 8
    $region17: #{tpu_custom_call.1} parent=1 // pred_fallthru
      _
    // Predicated region
    $region18: #{tpu_custom_call.1} parent=1 // pred_check
      _
    $region19: #{tpu_custom_call.1} parent=1 // pred_check_branch
      %38 = sbr.rel (0) target = $region21
    $region20: #{tpu_custom_call.1} parent=1 // pred_region
      _
    $region21: #{tpu_custom_call.1} parent=1 // pred_fallthru
      _
    // Predicated region
    $region22: #{tpu_custom_call.1} parent=1 // pred_check
      _
    $region23: #{tpu_custom_call.1} parent=1 // pred_check_branch
      %40 = sbr.rel (0) target = $region25
    $region24: #{tpu_custom_call.1} parent=1 // pred_region
      %42 = vsyncadd [#allocation7], 0
      %s43 = sshll.u32 %s5, 4
      %s44 = int_to_ptr.hbm [resolvable:$true] %s43
      %s45 = sshll.u32 [#allocation6], 4
      %s46 = int_to_ptr.vmem [resolvable:$true] %s45
      %51 = dma.hbm_to_vmem [thread:$0]  %s44, 2048, %s46, [#allocation7], 128, 128, 8
    $region25: #{tpu_custom_call.1} parent=1 // pred_fallthru
      _
    // Predicated region
    $region26: #{tpu_custom_call.1} parent=1 // pred_check
      _
    $region27: #{tpu_custom_call.1} parent=1 // pred_check_branch
      %53 = sbr.rel (0) target = $region29
    $region28: #{tpu_custom_call.1} parent=1 // pred_region
      _
    $region29: #{tpu_custom_call.1} parent=1 // pred_fallthru
      _
    // Predicated region
    $region30: #{tpu_custom_call.1} parent=1 // pred_check
      _
    $region31: #{tpu_custom_call.1} parent=1 // pred_check_branch
      %55 = sbr.rel (0) target = $region33
    $region32: #{tpu_custom_call.1} parent=1 // pred_region
      %57 = dma.done [#allocation4], 2048
    $region33: #{tpu_custom_call.1} parent=1 // pred_fallthru
      _
    // Predicated region
    $region34: #{tpu_custom_call.1} parent=1 // pred_check
      _
    $region35: #{tpu_custom_call.1} parent=1 // pred_check_branch
      %59 = sbr.rel (0) target = $region37
    $region36: #{tpu_custom_call.1} parent=1 // pred_region
      %61 = dma.done [#allocation7], 2048
    $region37: #{tpu_custom_call.1} parent=1 // pred_fallthru
      _
    %v62 = vld [vmem:[%s0] sm:$0xff]
    %v63 = vld [vmem:[%s0 + $0x8] sm:$0xff]
    %v64 = vld [vmem:[%s0 + $0x10] sm:$0xff]
    %v65 = vld [vmem:[%s0 + $0x18] sm:$0xff]
    %v66 = vld [vmem:[%s0 + $0x20] sm:$0xff]
    %v67 = vld [vmem:[%s0 + $0x28] sm:$0xff]
    %v68 = vld [vmem:[%s0 + $0x30] sm:$0xff]
    %v69 = vld [vmem:[%s0 + $0x38] sm:$0xff]
    %v70 = vld [vmem:[%s2] sm:$0xff]
    %v71 = vld [vmem:[%s2 + $0x8] sm:$0xff]
    %v72 = vld [vmem:[%s4] sm:$0x1]
    %v74 = vperm.slane %v72, 0
    %vm76 = vcmask 130048
    %v78 = vsel %vm76, %v62, 0
    %v81 = vsel %vm76, %v63, 0
    %v84 = vsel %vm76, %v64, 0
    %v87 = vsel %vm76, %v65, 0
    %v90 = vsel %vm76, %v66, 0
    %v93 = vsel %vm76, %v67, 0
    %v96 = vsel %vm76, %v68, 0
    %v99 = vsel %vm76, %v69, 0
    %101 = vmatpush.msra.mxu0 0.0
    %102 = vmatpush.msra.mxu0 0.0
    %103 = vmatpush.msra.mxu0 0.0
    %104 = vmatpush.msra.mxu0 0.0
    %105 = vmatpush.msra.mxu0 0.0
    %106 = vmatpush.msra.mxu0 0.0
    %107 = vmatpush.msra.mxu0 0.0
    %108 = vmatpush.msra.mxu0 0.0
    %109 = vmatpush.msra.mxu0 0.0
    %110 = vmatpush.msra.mxu0 0.0
    %111 = vmatpush.msra.mxu0 0.0
    %112 = vmatpush.msra.mxu0 0.0
    %113 = vmatpush.msra.mxu0 0.0
    %114 = vmatpush.msra.mxu0 0.0
    %115 = vmatpush.msra.mxu0 %v71
    %116 = vmatpush.msra.mxu0 %v70
    %117 = vmatmul.f32.gmra.mxu0 %v78
    %v118 = vpop.f32.mrf.mxu0
    %v119 = vadd.f32 %v74, %v118
    %120 = vmatmul.f32.gmra.mxu0 %v81
    %v121 = vpop.f32.mrf.mxu0
    %v122 = vadd.f32 %v74, %v121
    %123 = vmatmul.f32.gmra.mxu0 %v84
    %v124 = vpop.f32.mrf.mxu0
    %v125 = vadd.f32 %v74, %v124
    %126 = vmatmul.f32.gmra.mxu0 %v87
    %v127 = vpop.f32.mrf.mxu0
    %v128 = vadd.f32 %v74, %v127
    %129 = vmatmul.f32.gmra.mxu0 %v90
    %v130 = vpop.f32.mrf.mxu0
    %v131 = vadd.f32 %v74, %v130
    %132 = vmatmul.f32.gmra.mxu0 %v93
    %v133 = vpop.f32.mrf.mxu0
    %v134 = vadd.f32 %v74, %v133
    %135 = vmatmul.f32.gmra.mxu0 %v96
    %v136 = vpop.f32.mrf.mxu0
    %v137 = vadd.f32 %v74, %v136
    %138 = vmatmul.f32.gmra.mxu0 %v99
    %v139 = vpop.f32.mrf.mxu0
    %v140 = vadd.f32 %v74, %v139
    %141 = vdwg.mxu0
    %v142 = vld [vmem:[%s1] sm:$0xff]
    %v143 = vld [vmem:[#allocation3] sm:$0xff]
    %v144 = vld [vmem:[#allocation3 + $0x8] sm:$0xff]
    %v145 = vld [vmem:[#allocation3 + $0x10] sm:$0xff]
    %v146 = vld [vmem:[#allocation3 + $0x18] sm:$0xff]
    %v147 = vld [vmem:[#allocation3 + $0x20] sm:$0xff]
    %v148 = vld [vmem:[#allocation3 + $0x28] sm:$0xff]
    %v149 = vld [vmem:[#allocation3 + $0x30] sm:$0xff]
    %v150 = vld [vmem:[#allocation3 + $0x38] sm:$0xff]
    %v151 = vld [vmem:[#allocation3 + $0x40] sm:$0xff]
    %v152 = vld [vmem:[#allocation3 + $0x48] sm:$0xff]
    %v153 = vld [vmem:[#allocation3 + $0x50] sm:$0xff]
    %v154 = vld [vmem:[#allocation3 + $0x58] sm:$0xff]
    %v155 = vld [vmem:[#allocation3 + $0x60] sm:$0xff]
    %v156 = vld [vmem:[#allocation3 + $0x68] sm:$0xff]
    %v157 = vld [vmem:[#allocation3 + $0x70] sm:$0xff]
    %v158 = vld [vmem:[#allocation3 + $0x78] sm:$0xff]
    %159 = vmatpush.msra.mxu0 %v158
    %160 = vmatpush.msra.mxu0 %v157
    %161 = vmatpush.msra.mxu0 %v156
    %162 = vmatpush.msra.mxu0 %v155
    %163 = vmatpush.msra.mxu0 %v154
    %164 = vmatpush.msra.mxu0 %v153
    %165 = vmatpush.msra.mxu0 %v152
    %166 = vmatpush.msra.mxu0 %v151
    %167 = vmatpush.msra.mxu0 %v150
    %168 = vmatpush.msra.mxu0 %v149
    %169 = vmatpush.msra.mxu0 %v148
    %170 = vmatpush.msra.mxu0 %v147
    %171 = vmatpush.msra.mxu0 %v146
    %172 = vmatpush.msra.mxu0 %v145
    %173 = vmatpush.msra.mxu0 %v144
    %174 = vmatpush.msra.mxu0 %v143
    %175 = vmatmul.f32.gmra.mxu0 %v142
    %v176 = vpop.f32.mrf.mxu0
    %v177 = vadd.f32 0.0, %v176
    %178 = vdwg.mxu0
    %v179 = vadd.f32 %v119, %v177
    %v180 = vtanh.pop %v179
    %181 = vst [vmem:[#allocation2] sm:$0xff] %v180
    %v182 = vld [vmem:[#allocation3] sm:$0xff]
    %v183 = vld [vmem:[#allocation3 + $0x8] sm:$0xff]
    %v184 = vld [vmem:[#allocation3 + $0x10] sm:$0xff]
    %v185 = vld [vmem:[#allocation3 + $0x18] sm:$0xff]
    %v186 = vld [vmem:[#allocation3 + $0x20] sm:$0xff]
    %v187 = vld [vmem:[#allocation3 + $0x28] sm:$0xff]
    %v188 = vld [vmem:[#allocation3 + $0x30] sm:$0xff]
    %v189 = vld [vmem:[#allocation3 + $0x38] sm:$0xff]
    %v190 = vld [vmem:[#allocation3 + $0x40] sm:$0xff]
    %v191 = vld [vmem:[#allocation3 + $0x48] sm:$0xff]
    %v192 = vld [vmem:[#allocation3 + $0x50] sm:$0xff]
    %v193 = vld [vmem:[#allocation3 + $0x58] sm:$0xff]
    %v194 = vld [vmem:[#allocation3 + $0x60] sm:$0xff]
    %v195 = vld [vmem:[#allocation3 + $0x68] sm:$0xff]
    %v196 = vld [vmem:[#allocation3 + $0x70] sm:$0xff]
    %v197 = vld [vmem:[#allocation3 + $0x78] sm:$0xff]
    %198 = vmatpush.msra.mxu0 %v197
    %199 = vmatpush.msra.mxu0 %v196
    %200 = vmatpush.msra.mxu0 %v195
    %201 = vmatpush.msra.mxu0 %v194
    %202 = vmatpush.msra.mxu0 %v193
    %203 = vmatpush.msra.mxu0 %v192
    %204 = vmatpush.msra.mxu0 %v191
    %205 = vmatpush.msra.mxu0 %v190
    %206 = vmatpush.msra.mxu0 %v189
    %207 = vmatpush.msra.mxu0 %v188
    %208 = vmatpush.msra.mxu0 %v187
    %209 = vmatpush.msra.mxu0 %v186
    %210 = vmatpush.msra.mxu0 %v185
    %211 = vmatpush.msra.mxu0 %v184
    %212 = vmatpush.msra.mxu0 %v183
    %213 = vmatpush.msra.mxu0 %v182
    %214 = vmatmul.f32.gmra.mxu0 %v180
    %v215 = vpop.f32.mrf.mxu0
    %v216 = vadd.f32 0.0, %v215
    %217 = vdwg.mxu0
    %v218 = vadd.f32 %v122, %v216
    %v219 = vtanh.pop %v218
    %220 = vst [vmem:[#allocation2 + $0x8] sm:$0xff] %v219
    %v221 = vld [vmem:[#allocation3] sm:$0xff]
    %v222 = vld [vmem:[#allocation3 + $0x8] sm:$0xff]
    %v223 = vld [vmem:[#allocation3 + $0x10] sm:$0xff]
    %v224 = vld [vmem:[#allocation3 + $0x18] sm:$0xff]
    %v225 = vld [vmem:[#allocation3 + $0x20] sm:$0xff]
    %v226 = vld [vmem:[#allocation3 + $0x28] sm:$0xff]
    %v227 = vld [vmem:[#allocation3 + $0x30] sm:$0xff]
    %v228 = vld [vmem:[#allocation3 + $0x38] sm:$0xff]
    %v229 = vld [vmem:[#allocation3 + $0x40] sm:$0xff]
    %v230 = vld [vmem:[#allocation3 + $0x48] sm:$0xff]
    %v231 = vld [vmem:[#allocation3 + $0x50] sm:$0xff]
    %v232 = vld [vmem:[#allocation3 + $0x58] sm:$0xff]
    %v233 = vld [vmem:[#allocation3 + $0x60] sm:$0xff]
    %v234 = vld [vmem:[#allocation3 + $0x68] sm:$0xff]
    %v235 = vld [vmem:[#allocation3 + $0x70] sm:$0xff]
    %v236 = vld [vmem:[#allocation3 + $0x78] sm:$0xff]
    %237 = vmatpush.msra.mxu0 %v236
    %238 = vmatpush.msra.mxu0 %v235
    %239 = vmatpush.msra.mxu0 %v234
    %240 = vmatpush.msra.mxu0 %v233
    %241 = vmatpush.msra.mxu0 %v232
    %242 = vmatpush.msra.mxu0 %v231
    %243 = vmatpush.msra.mxu0 %v230
    %244 = vmatpush.msra.mxu0 %v229
    %245 = vmatpush.msra.mxu0 %v228
    %246 = vmatpush.msra.mxu0 %v227
    %247 = vmatpush.msra.mxu0 %v226
    %248 = vmatpush.msra.mxu0 %v225
    %249 = vmatpush.msra.mxu0 %v224
    %250 = vmatpush.msra.mxu0 %v223
    %251 = vmatpush.msra.mxu0 %v222
    %252 = vmatpush.msra.mxu0 %v221
    %253 = vmatmul.f32.gmra.mxu0 %v219
    %v254 = vpop.f32.mrf.mxu0
    %v255 = vadd.f32 0.0, %v254
    %256 = vdwg.mxu0
    %v257 = vadd.f32 %v125, %v255
    %v258 = vtanh.pop %v257
    %259 = vst [vmem:[#allocation2 + $0x10] sm:$0xff] %v258
    %v260 = vld [vmem:[#allocation3] sm:$0xff]
    %v261 = vld [vmem:[#allocation3 + $0x8] sm:$0xff]
    %v262 = vld [vmem:[#allocation3 + $0x10] sm:$0xff]
    %v263 = vld [vmem:[#allocation3 + $0x18] sm:$0xff]
    %v264 = vld [vmem:[#allocation3 + $0x20] sm:$0xff]
    %v265 = vld [vmem:[#allocation3 + $0x28] sm:$0xff]
    %v266 = vld [vmem:[#allocation3 + $0x30] sm:$0xff]
    %v267 = vld [vmem:[#allocation3 + $0x38] sm:$0xff]
    %v268 = vld [vmem:[#allocation3 + $0x40] sm:$0xff]
    %v269 = vld [vmem:[#allocation3 + $0x48] sm:$0xff]
    %v270 = vld [vmem:[#allocation3 + $0x50] sm:$0xff]
    %v271 = vld [vmem:[#allocation3 + $0x58] sm:$0xff]
    %v272 = vld [vmem:[#allocation3 + $0x60] sm:$0xff]
    %v273 = vld [vmem:[#allocation3 + $0x68] sm:$0xff]
    %v274 = vld [vmem:[#allocation3 + $0x70] sm:$0xff]
    %v275 = vld [vmem:[#allocation3 + $0x78] sm:$0xff]
    %276 = vmatpush.msra.mxu0 %v275
    %277 = vmatpush.msra.mxu0 %v274
    %278 = vmatpush.msra.mxu0 %v273
    %279 = vmatpush.msra.mxu0 %v272
    %280 = vmatpush.msra.mxu0 %v271
    %281 = vmatpush.msra.mxu0 %v270
    %282 = vmatpush.msra.mxu0 %v269
    %283 = vmatpush.msra.mxu0 %v268
    %284 = vmatpush.msra.mxu0 %v267
    %285 = vmatpush.msra.mxu0 %v266
    %286 = vmatpush.msra.mxu0 %v265
    %287 = vmatpush.msra.mxu0 %v264
    %288 = vmatpush.msra.mxu0 %v263
    %289 = vmatpush.msra.mxu0 %v262
    %290 = vmatpush.msra.mxu0 %v261
    %291 = vmatpush.msra.mxu0 %v260
    %292 = vmatmul.f32.gmra.mxu0 %v258
    %v293 = vpop.f32.mrf.mxu0
    %v294 = vadd.f32 0.0, %v293
    %295 = vdwg.mxu0
    %v296 = vadd.f32 %v128, %v294
    %v297 = vtanh.pop %v296
    %298 = vst [vmem:[#allocation2 + $0x18] sm:$0xff] %v297
    %v299 = vld [vmem:[#allocation3] sm:$0xff]
    %v300 = vld [vmem:[#allocation3 + $0x8] sm:$0xff]
    %v301 = vld [vmem:[#allocation3 + $0x10] sm:$0xff]
    %v302 = vld [vmem:[#allocation3 + $0x18] sm:$0xff]
    %v303 = vld [vmem:[#allocation3 + $0x20] sm:$0xff]
    %v304 = vld [vmem:[#allocation3 + $0x28] sm:$0xff]
    %v305 = vld [vmem:[#allocation3 + $0x30] sm:$0xff]
    %v306 = vld [vmem:[#allocation3 + $0x38] sm:$0xff]
    %v307 = vld [vmem:[#allocation3 + $0x40] sm:$0xff]
    %v308 = vld [vmem:[#allocation3 + $0x48] sm:$0xff]
    %v309 = vld [vmem:[#allocation3 + $0x50] sm:$0xff]
    %v310 = vld [vmem:[#allocation3 + $0x58] sm:$0xff]
    %v311 = vld [vmem:[#allocation3 + $0x60] sm:$0xff]
    %v312 = vld [vmem:[#allocation3 + $0x68] sm:$0xff]
    %v313 = vld [vmem:[#allocation3 + $0x70] sm:$0xff]
    %v314 = vld [vmem:[#allocation3 + $0x78] sm:$0xff]
    %315 = vmatpush.msra.mxu0 %v314
    %316 = vmatpush.msra.mxu0 %v313
    %317 = vmatpush.msra.mxu0 %v312
    %318 = vmatpush.msra.mxu0 %v311
    %319 = vmatpush.msra.mxu0 %v310
    %320 = vmatpush.msra.mxu0 %v309
    %321 = vmatpush.msra.mxu0 %v308
    %322 = vmatpush.msra.mxu0 %v307
    %323 = vmatpush.msra.mxu0 %v306
    %324 = vmatpush.msra.mxu0 %v305
    %325 = vmatpush.msra.mxu0 %v304
    %326 = vmatpush.msra.mxu0 %v303
    %327 = vmatpush.msra.mxu0 %v302
    %328 = vmatpush.msra.mxu0 %v301
    %329 = vmatpush.msra.mxu0 %v300
    %330 = vmatpush.msra.mxu0 %v299
    %331 = vmatmul.f32.gmra.mxu0 %v297
    %v332 = vpop.f32.mrf.mxu0
    %v333 = vadd.f32 0.0, %v332
    %334 = vdwg.mxu0
    %v335 = vadd.f32 %v131, %v333
    %v336 = vtanh.pop %v335
    %337 = vst [vmem:[#allocation2 + $0x20] sm:$0xff] %v336
    %v338 = vld [vmem:[#allocation3] sm:$0xff]
    %v339 = vld [vmem:[#allocation3 + $0x8] sm:$0xff]
    %v340 = vld [vmem:[#allocation3 + $0x10] sm:$0xff]
    %v341 = vld [vmem:[#allocation3 + $0x18] sm:$0xff]
    %v342 = vld [vmem:[#allocation3 + $0x20] sm:$0xff]
    %v343 = vld [vmem:[#allocation3 + $0x28] sm:$0xff]
    %v344 = vld [vmem:[#allocation3 + $0x30] sm:$0xff]
    %v345 = vld [vmem:[#allocation3 + $0x38] sm:$0xff]
    %v346 = vld [vmem:[#allocation3 + $0x40] sm:$0xff]
    %v347 = vld [vmem:[#allocation3 + $0x48] sm:$0xff]
    %v348 = vld [vmem:[#allocation3 + $0x50] sm:$0xff]
    %v349 = vld [vmem:[#allocation3 + $0x58] sm:$0xff]
    %v350 = vld [vmem:[#allocation3 + $0x60] sm:$0xff]
    %v351 = vld [vmem:[#allocation3 + $0x68] sm:$0xff]
    %v352 = vld [vmem:[#allocation3 + $0x70] sm:$0xff]
    %v353 = vld [vmem:[#allocation3 + $0x78] sm:$0xff]
    %354 = vmatpush.msra.mxu0 %v353
    %355 = vmatpush.msra.mxu0 %v352
    %356 = vmatpush.msra.mxu0 %v351
    %357 = vmatpush.msra.mxu0 %v350
    %358 = vmatpush.msra.mxu0 %v349
    %359 = vmatpush.msra.mxu0 %v348
    %360 = vmatpush.msra.mxu0 %v347
    %361 = vmatpush.msra.mxu0 %v346
    %362 = vmatpush.msra.mxu0 %v345
    %363 = vmatpush.msra.mxu0 %v344
    %364 = vmatpush.msra.mxu0 %v343
    %365 = vmatpush.msra.mxu0 %v342
    %366 = vmatpush.msra.mxu0 %v341
    %367 = vmatpush.msra.mxu0 %v340
    %368 = vmatpush.msra.mxu0 %v339
    %369 = vmatpush.msra.mxu0 %v338
    %370 = vmatmul.f32.gmra.mxu0 %v336
    %v371 = vpop.f32.mrf.mxu0
    %v372 = vadd.f32 0.0, %v371
    %373 = vdwg.mxu0
    %v374 = vadd.f32 %v134, %v372
    %v375 = vtanh.pop %v374
    %376 = vst [vmem:[#allocation2 + $0x28] sm:$0xff] %v375
    %v377 = vld [vmem:[#allocation3] sm:$0xff]
    %v378 = vld [vmem:[#allocation3 + $0x8] sm:$0xff]
    %v379 = vld [vmem:[#allocation3 + $0x10] sm:$0xff]
    %v380 = vld [vmem:[#allocation3 + $0x18] sm:$0xff]
    %v381 = vld [vmem:[#allocation3 + $0x20] sm:$0xff]
    %v382 = vld [vmem:[#allocation3 + $0x28] sm:$0xff]
    %v383 = vld [vmem:[#allocation3 + $0x30] sm:$0xff]
    %v384 = vld [vmem:[#allocation3 + $0x38] sm:$0xff]
    %v385 = vld [vmem:[#allocation3 + $0x40] sm:$0xff]
    %v386 = vld [vmem:[#allocation3 + $0x48] sm:$0xff]
    %v387 = vld [vmem:[#allocation3 + $0x50] sm:$0xff]
    %v388 = vld [vmem:[#allocation3 + $0x58] sm:$0xff]
    %v389 = vld [vmem:[#allocation3 + $0x60] sm:$0xff]
    %v390 = vld [vmem:[#allocation3 + $0x68] sm:$0xff]
    %v391 = vld [vmem:[#allocation3 + $0x70] sm:$0xff]
    %v392 = vld [vmem:[#allocation3 + $0x78] sm:$0xff]
    %393 = vmatpush.msra.mxu0 %v392
    %394 = vmatpush.msra.mxu0 %v391
    %395 = vmatpush.msra.mxu0 %v390
    %396 = vmatpush.msra.mxu0 %v389
    %397 = vmatpush.msra.mxu0 %v388
    %398 = vmatpush.msra.mxu0 %v387
    %399 = vmatpush.msra.mxu0 %v386
    %400 = vmatpush.msra.mxu0 %v385
    %401 = vmatpush.msra.mxu0 %v384
    %402 = vmatpush.msra.mxu0 %v383
    %403 = vmatpush.msra.mxu0 %v382
    %404 = vmatpush.msra.mxu0 %v381
    %405 = vmatpush.msra.mxu0 %v380
    %406 = vmatpush.msra.mxu0 %v379
    %407 = vmatpush.msra.mxu0 %v378
    %408 = vmatpush.msra.mxu0 %v377
    %409 = vmatmul.f32.gmra.mxu0 %v375
    %v410 = vpop.f32.mrf.mxu0
    %v411 = vadd.f32 0.0, %v410
    %412 = vdwg.mxu0
    %v413 = vadd.f32 %v137, %v411
    %v414 = vtanh.pop %v413
    %415 = vst [vmem:[#allocation2 + $0x30] sm:$0xff] %v414
    %v416 = vld [vmem:[#allocation3] sm:$0xff]
    %v417 = vld [vmem:[#allocation3 + $0x8] sm:$0xff]
    %v418 = vld [vmem:[#allocation3 + $0x10] sm:$0xff]
    %v419 = vld [vmem:[#allocation3 + $0x18] sm:$0xff]
    %v420 = vld [vmem:[#allocation3 + $0x20] sm:$0xff]
    %v421 = vld [vmem:[#allocation3 + $0x28] sm:$0xff]
    %v422 = vld [vmem:[#allocation3 + $0x30] sm:$0xff]
    %v423 = vld [vmem:[#allocation3 + $0x38] sm:$0xff]
    %v424 = vld [vmem:[#allocation3 + $0x40] sm:$0xff]
    %v425 = vld [vmem:[#allocation3 + $0x48] sm:$0xff]
    %v426 = vld [vmem:[#allocation3 + $0x50] sm:$0xff]
    %v427 = vld [vmem:[#allocation3 + $0x58] sm:$0xff]
    %v428 = vld [vmem:[#allocation3 + $0x60] sm:$0xff]
    %v429 = vld [vmem:[#allocation3 + $0x68] sm:$0xff]
    %v430 = vld [vmem:[#allocation3 + $0x70] sm:$0xff]
    %v431 = vld [vmem:[#allocation3 + $0x78] sm:$0xff]
    %432 = vmatpush.msra.mxu0 %v431
    %433 = vmatpush.msra.mxu0 %v430
    %434 = vmatpush.msra.mxu0 %v429
    %435 = vmatpush.msra.mxu0 %v428
    %436 = vmatpush.msra.mxu0 %v427
    %437 = vmatpush.msra.mxu0 %v426
    %438 = vmatpush.msra.mxu0 %v425
    %439 = vmatpush.msra.mxu0 %v424
    %440 = vmatpush.msra.mxu0 %v423
    %441 = vmatpush.msra.mxu0 %v422
    %442 = vmatpush.msra.mxu0 %v421
    %443 = vmatpush.msra.mxu0 %v420
    %444 = vmatpush.msra.mxu0 %v419
    %445 = vmatpush.msra.mxu0 %v418
    %446 = vmatpush.msra.mxu0 %v417
    %447 = vmatpush.msra.mxu0 %v416
    %448 = vmatmul.f32.gmra.mxu0 %v414
    %v449 = vpop.f32.mrf.mxu0
    %v450 = vadd.f32 0.0, %v449
    %451 = vdwg.mxu0
    %v452 = vadd.f32 %v140, %v450
    %v453 = vtanh.pop %v452
    %454 = vst [vmem:[#allocation2 + $0x38] sm:$0xff] %v453
    %455 = vst [vmem:[#allocation9] sm:$0xff] %v453
    %v456 = vld [vmem:[#allocation2] sm:$0xff]
    %v457 = vld [vmem:[#allocation2 + $0x8] sm:$0xff]
    %v458 = vld [vmem:[#allocation2 + $0x10] sm:$0xff]
    %v459 = vld [vmem:[#allocation2 + $0x18] sm:$0xff]
    %v460 = vld [vmem:[#allocation2 + $0x20] sm:$0xff]
    %v461 = vld [vmem:[#allocation2 + $0x28] sm:$0xff]
    %v462 = vld [vmem:[#allocation2 + $0x30] sm:$0xff]
    %v463 = vld [vmem:[#allocation2 + $0x38] sm:$0xff]
    %v464 = vld [vmem:[#allocation6] sm:$0xff]
    %v465 = vld [vmem:[#allocation6 + $0x8] sm:$0xff]
    %v466 = vld [vmem:[#allocation6 + $0x10] sm:$0xff]
    %v467 = vld [vmem:[#allocation6 + $0x18] sm:$0xff]
    %v468 = vld [vmem:[#allocation6 + $0x20] sm:$0xff]
    %v469 = vld [vmem:[#allocation6 + $0x28] sm:$0xff]
    %v470 = vld [vmem:[#allocation6 + $0x30] sm:$0xff]
    %v471 = vld [vmem:[#allocation6 + $0x38] sm:$0xff]
    %v472 = vld [vmem:[#allocation6 + $0x40] sm:$0xff]
    %v473 = vld [vmem:[#allocation6 + $0x48] sm:$0xff]
    %v474 = vld [vmem:[#allocation6 + $0x50] sm:$0xff]
    %v475 = vld [vmem:[#allocation6 + $0x58] sm:$0xff]
    %v476 = vld [vmem:[#allocation6 + $0x60] sm:$0xff]
    %v477 = vld [vmem:[#allocation6 + $0x68] sm:$0xff]
    %v478 = vld [vmem:[#allocation6 + $0x70] sm:$0xff]
    %v479 = vld [vmem:[#allocation6 + $0x78] sm:$0xff]
    %v480 = vld [vmem:[%s6] sm:$0x1]
    %v482 = vperm.slane %v480, 0
    %484 = vmatpush.msra.mxu0 %v479
    %485 = vmatpush.msra.mxu0 %v478
    %486 = vmatpush.msra.mxu0 %v477
    %487 = vmatpush.msra.mxu0 %v476
    %488 = vmatpush.msra.mxu0 %v475
    %489 = vmatpush.msra.mxu0 %v474
    %490 = vmatpush.msra.mxu0 %v473
    %491 = vmatpush.msra.mxu0 %v472
    %492 = vmatpush.msra.mxu0 %v471
    %493 = vmatpush.msra.mxu0 %v470
    %494 = vmatpush.msra.mxu0 %v469
    %495 = vmatpush.msra.mxu0 %v468
    %496 = vmatpush.msra.mxu0 %v467
    %497 = vmatpush.msra.mxu0 %v466
    %498 = vmatpush.msra.mxu0 %v465
    %499 = vmatpush.msra.mxu0 %v464
    %500 = vmatmul.f32.gmra.mxu0 %v456
    %v501 = vpop.f32.mrf.mxu0
    %v502 = vadd.f32 %v482, %v501
    %503 = vmatmul.f32.gmra.mxu0 %v457
    %v504 = vpop.f32.mrf.mxu0
    %v505 = vadd.f32 %v482, %v504
    %506 = vmatmul.f32.gmra.mxu0 %v458
    %v507 = vpop.f32.mrf.mxu0
    %v508 = vadd.f32 %v482, %v507
    %509 = vmatmul.f32.gmra.mxu0 %v459
    %v510 = vpop.f32.mrf.mxu0
    %v511 = vadd.f32 %v482, %v510
    %512 = vmatmul.f32.gmra.mxu0 %v460
    %v513 = vpop.f32.mrf.mxu0
    %v514 = vadd.f32 %v482, %v513
    %515 = vmatmul.f32.gmra.mxu0 %v461
    %v516 = vpop.f32.mrf.mxu0
    %v517 = vadd.f32 %v482, %v516
    %518 = vmatmul.f32.gmra.mxu0 %v462
    %v519 = vpop.f32.mrf.mxu0
    %v520 = vadd.f32 %v482, %v519
    %521 = vmatmul.f32.gmra.mxu0 %v463
    %v522 = vpop.f32.mrf.mxu0
    %v523 = vadd.f32 %v482, %v522
    %524 = vdwg.mxu0
    %525 = vst [vmem:[#allocation8] sm:$0xff] %v502
    %526 = vst [vmem:[#allocation8 + $0x8] sm:$0xff] %v505
    %527 = vst [vmem:[#allocation8 + $0x10] sm:$0xff] %v508
    %528 = vst [vmem:[#allocation8 + $0x18] sm:$0xff] %v511
    %529 = vst [vmem:[#allocation8 + $0x20] sm:$0xff] %v514
    %530 = vst [vmem:[#allocation8 + $0x28] sm:$0xff] %v517
    %531 = vst [vmem:[#allocation8 + $0x30] sm:$0xff] %v520
    %532 = vst [vmem:[#allocation8 + $0x38] sm:$0xff] %v523
    // Predicated region
    $region38: #{tpu_custom_call.1} parent=1 // pred_check
      _
    $region39: #{tpu_custom_call.1} parent=1 // pred_check_branch
      %534 = sbr.rel (0) target = $region41
    $region40: #{tpu_custom_call.1} parent=1 // pred_region
      %536 = vsyncadd [#allocation5], 0
      %s537 = sshll.u32 [#allocation8], 4
      %s538 = int_to_ptr.vmem [resolvable:$true] %s537
      %s539 = sshll.u32 %s7, 4
      %s540 = int_to_ptr.hbm [resolvable:$true] %s539
      %545 = dma.vmem_to_hbm [thread:$0]  %s538, 1024, %s540, [#allocation5], 128, 128, 8
    $region41: #{tpu_custom_call.1} parent=1 // pred_fallthru
      _
    // Predicated region
    $region42: #{tpu_custom_call.1} parent=1 // pred_check
      _
    $region43: #{tpu_custom_call.1} parent=1 // pred_check_branch
      %547 = sbr.rel (0) target = $region45
    $region44: #{tpu_custom_call.1} parent=1 // pred_region
      %549 = vsyncadd [#allocation10], 0
      %s551 = sshll.u32 [#allocation9], 4
      %s552 = int_to_ptr.vmem [resolvable:$true] %s551
      %s553 = sshll.u32 %s8, 4
      %s554 = int_to_ptr.hbm [resolvable:$true] %s553
      %556 = dma.vmem_to_hbm [thread:$0]  %s552, 128, %s554, [#allocation10]
    $region45: #{tpu_custom_call.1} parent=1 // pred_fallthru
      _
    // Predicated region
    $region46: #{tpu_custom_call.1} parent=1 // pred_check
      _
    $region47: #{tpu_custom_call.1} parent=1 // pred_check_branch
      %558 = sbr.rel (0) target = $region49
    $region48: #{tpu_custom_call.1} parent=1 // pred_region
      %560 = dma.done [#allocation5], 1024
    $region49: #{tpu_custom_call.1} parent=1 // pred_fallthru
      _
    // Predicated region
    $region50: #{tpu_custom_call.1} parent=1 // pred_check
      _
    $region51: #{tpu_custom_call.1} parent=1 // pred_check_branch
      %562 = sbr.rel (0) target = $region53
    $region52: #{tpu_custom_call.1} parent=1 // pred_region
      %564 = dma.done [#allocation10], 128
    $region53: #{tpu_custom_call.1} parent=1 // pred_fallthru
      _
    %565 = vsyncpa [#allocation4], 1
    %566 = vsyncpa [#allocation7], 1
    %567 = vsyncpa [#allocation5], 1
    %568 = vsyncpa [#allocation10], 1

</llo_original>
